<compile_context>
chip_gen: v6e
topology: v6e:2x2x1
jax: 0.10.0
libtpu: 0.0.40
codegen_flags: <defaults>
</compile_context>

<pallas_src>
import functools
import math

import jax
import jax.numpy as jnp
from jax import lax
from jax.experimental import pallas as pl
from jax.experimental.pallas import tpu as pltpu

_E = math.e


def _net_tanh_relg_kernel(x_ref, w1_ref, b1_ref, w3_ref, out_ref, *,
                          log_std_min, log_std_max):
    """One batch tile: x_ref (TB, NIN) row-major -> out_ref (2, TB) lane-dense."""
    x = x_ref[...].astype(w1_ref.dtype)                         # (TB, NIN)

    # fc1 as an NT contraction on nin: (H, NIN) . (TB, NIN)^T -> (H, TB).
    # Batch lands on the lane axis; the tiny rhs transpose is free XLU filler.
    z0 = lax.dot_general(w1_ref[...], x, (((1,), (1,)), ((), ())),
                         preferred_element_type=jnp.float32)     # (H, TB)

    # Effective bias (fc1.bias + 10*(exp(1+bias)-e)) precomputed wrapper-side.
    z1 = jnp.tanh(z0 + b1_ref[...])                              # (H, TB)
    # NOTE: on v6e/v7x, jnp.tanh(z0.astype(jnp.bfloat16)) raises EUP throughput
    # if the single EUP slot ever becomes critical; kept f32 for PyTorch parity.

    # fc3 (bias-free): (2, H) . (H, TB) -> (2, TB).
    out = jnp.dot(w3_ref[...], z1, preferred_element_type=jnp.float32)

    # Epilogue: row 0 stays mu, row 1 becomes sigma = exp(clip(out - 1)).
    # Pure elementwise VPU/EUP work on the already lane-dense tile.
    row = lax.broadcasted_iota(jnp.int32, out.shape, dimension=0)
    sig = jnp.exp(jnp.clip(out - 1.0, log_std_min, log_std_max))
    out_ref[...] = jnp.where(row == 1, sig, out).astype(out_ref.dtype)


def net_tanh_relg_forward(x, params, *, log_std_min=-20.0, log_std_max=0.0,
                          masked_ftrs=(), ftr_normalizer=None, block_b=2048):
    """Returns (mu, sigma) of the Normal distribution, each of shape (B,)."""
    w1, b1, w3 = params          # PyTorch layouts: (H, nin_kept), (H,), (2, H)
    B, nin = x.shape
    H = w1.shape[0]

    # ---- Parameter-only preprocessing (x itself is left untouched in HBM). ----
    masked = sorted({int(i) for i in masked_ftrs})
    keep = [i for i in range(nin) if i not in masked]
    assert w1.shape == (H, len(keep)) and b1.shape == (H,) and w3.shape == (2, H)

    w1_eff = w1.astype(jnp.float32)
    if ftr_normalizer is not None:
        # fc1(x_kept * n) == x_kept @ (w1 * n).T  -> fold the normalizer into w1.
        w1_eff = w1_eff * jnp.asarray(ftr_normalizer, jnp.float32)[None, :]
    if masked:
        # Scatter kept columns into a full-width weight; masked columns are zero,
        # so streaming the unmasked x is mathematically identical to masking it.
        w1_full = (jnp.zeros((H, nin), jnp.float32)
                   .at[:, jnp.asarray(keep, jnp.int32)].set(w1_eff))
    else:
        w1_full = w1_eff

    b1_f = b1.astype(jnp.float32)
    b1_eff = (b1_f + 10.0 * (jnp.exp(1.0 + b1_f) - _E)).reshape(H, 1)  # (H, 1)
    w3_f = w3.astype(jnp.float32)                                      # (2, H)

    # ---- Batch tiling. ----
    # Small B: one exact tile (block == full dims), zero padding, zero copies.
    # Large B: lane-aligned tile, >= 2 grid steps so both v7x TensorCores work.
    if B <= 256:
        tb = B
    else:
        tb = min(int(block_b), pl.cdiv(pl.cdiv(B, 2), 128) * 128)
    b_pad = pl.cdiv(B, tb) * tb

    x_in = x.astype(jnp.float32)
    if b_pad != B:
        x_in = jnp.pad(x_in, ((0, b_pad - B), (0, 0)))  # only when B % tb != 0

    kernel = functools.partial(_net_tanh_relg_kernel,
                               log_std_min=float(log_std_min),
                               log_std_max=float(log_std_max))

    out = pl.pallas_call(
        kernel,
        out_shape=jax.ShapeDtypeStruct((2, b_pad), jnp.float32),
        grid=(b_pad // tb,),
        in_specs=[
            pl.BlockSpec((tb, nin), lambda i: (i, 0)),   # streamed x tile (row-major)
            pl.BlockSpec((H, nin), lambda i: (0, 0)),    # resident parameters
            pl.BlockSpec((H, 1), lambda i: (0, 0)),
            pl.BlockSpec((2, H), lambda i: (0, 0)),
        ],
        out_specs=pl.BlockSpec((2, tb), lambda i: (0, i)),
        compiler_params=pltpu.CompilerParams(
            dimension_semantics=("parallel",)),
    )(x_in, w1_full, b1_eff, w3_f)

    return out[0, :B], out[1, :B]


def init_params(key, nin, n_hidden=128):
    """Parameters in PyTorch-native layouts, matching NetTanhReLG's init.

    fc2 exists in the module but is never used by forward(), so it is omitted.
    """
    k1, k2, k3 = jax.random.split(key, 3)
    w1 = 0.5 * jax.random.normal(k1, (n_hidden, nin), jnp.float32)    # fc1.weight
    b1 = 0.05 * jax.random.normal(k2, (n_hidden,), jnp.float32)       # fc1.bias
    w3 = 0.01 * jax.random.normal(k3, (2, n_hidden), jnp.float32)     # fc3.weight
    return (w1, b1, w3)


def reference_forward(x, params, log_std_min=-20.0, log_std_max=0.0,
                      masked_ftrs=(), ftr_normalizer=None):
    """Pure-JAX float32 reference of the PyTorch forward."""
    w1, b1, w3 = params
    x_ = x
    if len(masked_ftrs) > 0:
        keep = [i for i in range(x.shape[1]) if i not in set(masked_ftrs)]
        x_ = x_[:, jnp.asarray(keep, jnp.int32)]
    if ftr_normalizer is not None:
        x_ = x_ * jnp.asarray(ftr_normalizer, jnp.float32)
    z0 = jnp.dot(x_, w1.T, precision=lax.Precision.HIGHEST)
    z0 = z0 + b1 + 10.0 * (jnp.exp(1.0 + b1) - _E)
    z1 = jnp.tanh(z0)
    out = jnp.dot(z1, w3.T, precision=lax.Precision.HIGHEST)
    mu = out[:, 0]
    log_std = jnp.clip(out[:, 1] - 1.0, log_std_min, log_std_max)
    return mu, jnp.exp(log_std)


if __name__ == "__main__":
    key = jax.random.PRNGKey(0)
    k_x, k_x2, k_p = jax.random.split(key, 3)

    B, NIN, NH = 8, 16, 128
    params = init_params(k_p, NIN, NH)

    # Tolerance note: kernel and reference are both f32, but the MXU f32
    # pass-precision mode may differ slightly between Mosaic and XLA; real
    # layout/semantics bugs would be orders of magnitude larger than this.
    ATOL, RTOL = 2e-3, 1e-2

    # --- Small batch: single exact tile, no padding, grid = 1. ---
    x = jax.random.normal(k_x, (B, NIN), jnp.float32)
    mu, sig = net_tanh_relg_forward(x, params)
    mu, sig = jax.block_until_ready((mu, sig))
    mu_ref, sig_ref = reference_forward(x, params)
    assert mu.shape == (B,) and sig.shape == (B,)
    assert jnp.allclose(mu, mu_ref, atol=ATOL, rtol=RTOL), (mu, mu_ref)
    assert jnp.allclose(sig, sig_ref, atol=ATOL, rtol=RTOL), (sig, sig_ref)

    # --- Larger batch: exercises the multi-tile path (grid = 2, no padding). ---
    B2 = 512
    x2 = jax.random.normal(k_x2, (B2, NIN), jnp.float32)
    mu2, sig2 = net_tanh_relg_forward(x2, params)
    mu2, sig2 = jax.block_until_ready((mu2, sig2))
    mu2_ref, sig2_ref = reference_forward(x2, params)
    assert jnp.allclose(mu2, mu2_ref, atol=ATOL, rtol=RTOL)
    assert jnp.allclose(sig2, sig2_ref, atol=ATOL, rtol=RTOL)

    print("KERNEL_OK")
</pallas_src>

<mosaic_0001>
module attributes {stable_mosaic.version = 11 : i64} {
  func.func @_net_tanh_relg_kernel(%arg0: i32, %arg1: memref<8x16xf32, #tpu.memory_space<vmem>>, %arg2: memref<128x16xf32, #tpu.memory_space<vmem>>, %arg3: memref<128x1xf32, #tpu.memory_space<vmem>>, %arg4: memref<2x128xf32, #tpu.memory_space<vmem>>, %arg5: memref<2x8xf32, #tpu.memory_space<vmem>>) attributes {dimension_semantics = [#tpu.dimension_semantics<parallel>], iteration_bounds = array<i64: 1>, scalar_prefetch = 0 : i64, scratch_operands = 0 : i64, tpu.core_type = #tpu.core_type<tc>, window_params = [{transform_indices = @transform_0, window_bounds = array<i64: 8, 16>}, {pipeline_mode = #tpu.pipeline_mode<synchronous>, transform_indices = @transform_1, window_bounds = array<i64: 128, 16>}, {pipeline_mode = #tpu.pipeline_mode<synchronous>, transform_indices = @transform_2, window_bounds = array<i64: 128, 1>}, {pipeline_mode = #tpu.pipeline_mode<synchronous>, transform_indices = @transform_3, window_bounds = array<i64: 2, 128>}, {transform_indices = @transform_4, window_bounds = array<i64: 2, 8>}]} {
    %c0 = arith.constant 0 : index
    %c0_0 = arith.constant 0 : index
    %0 = vector.load %arg1[%c0, %c0_0] : memref<8x16xf32, #tpu.memory_space<vmem>>, vector<8x16xf32>
    %c0_1 = arith.constant 0 : index
    %c0_2 = arith.constant 0 : index
    %1 = vector.load %arg2[%c0_1, %c0_2] : memref<128x16xf32, #tpu.memory_space<vmem>>, vector<128x16xf32>
    %cst = arith.constant dense<0.000000e+00> : vector<128x8xf32>
    %2 = tpu.matmul %1, %0, %cst {dimension_numbers = #tpu.dot_dimension_numbers<[1], [1], [0], [0], [0, 0, 1, 0], [], []>} : vector<128x16xf32>, vector<8x16xf32>, vector<128x8xf32> -> vector<128x8xf32>
    %c0_3 = arith.constant 0 : index
    %c0_4 = arith.constant 0 : index
    %3 = vector.load %arg3[%c0_3, %c0_4] : memref<128x1xf32, #tpu.memory_space<vmem>>, vector<128x1xf32>
    %4 = vector.broadcast %3 : vector<128x1xf32> to vector<128x8xf32>
    %5 = arith.addf %2, %4 : vector<128x8xf32>
    %6 = math.tanh %5 : vector<128x8xf32>
    %c0_5 = arith.constant 0 : index
    %c0_6 = arith.constant 0 : index
    %7 = vector.load %arg4[%c0_5, %c0_6] : memref<2x128xf32, #tpu.memory_space<vmem>>, vector<2x128xf32>
    %cst_7 = arith.constant dense<0.000000e+00> : vector<2x8xf32>
    %8 = tpu.matmul %7, %6, %cst_7 {dimension_numbers = #tpu.dot_dimension_numbers<[1], [0], [0], [1], [0, 0, 1, 1], [], []>} : vector<2x128xf32>, vector<128x8xf32>, vector<2x8xf32> -> vector<2x8xf32>
    %9 = tpu.iota {dimensions = array<i32: 0>} : vector<2x8xi32>
    %cst_8 = arith.constant 1.000000e+00 : f32
    %10 = vector.broadcast %cst_8 : f32 to vector<2x8xf32>
    %11 = arith.subf %8, %10 : vector<2x8xf32>
    %cst_9 = arith.constant -2.000000e+01 : f32
    %cst_10 = arith.constant 0.000000e+00 : f32
    %12 = vector.broadcast %cst_9 : f32 to vector<2x8xf32>
    %13 = arith.maximumf %12, %11 : vector<2x8xf32>
    %14 = vector.broadcast %cst_10 : f32 to vector<2x8xf32>
    %15 = arith.minimumf %14, %13 : vector<2x8xf32>
    %16 = math.exp %15 : vector<2x8xf32>
    %c1_i32 = arith.constant 1 : i32
    %17 = vector.broadcast %c1_i32 : i32 to vector<2x8xi32>
    %18 = arith.cmpi eq, %9, %17 : vector<2x8xi32>
    %19 = arith.select %18, %16, %8 : vector<2x8xi1>, vector<2x8xf32>
    %c0_11 = arith.constant 0 : index
    %c0_12 = arith.constant 0 : index
    %20 = vector.load %arg5[%c0_11, %c0_12] : memref<2x8xf32, #tpu.memory_space<vmem>>, vector<2x8xf32>
    tpu.vector_store %arg5[%c0_11, %c0_12], %19 {strides = array<i32>} : memref<2x8xf32, #tpu.memory_space<vmem>>, vector<2x8xf32>,
    return
  }
  func.func @transform_0(%arg0: i32) -> (i32, i32) {
    %c0_i32 = arith.constant 0 : i32
    %c0_i32_0 = arith.constant 0 : i32
    return %arg0, %c0_i32 : i32, i32
  }
  func.func @transform_1(%arg0: i32) -> (i32, i32) {
    %c0_i32 = arith.constant 0 : i32
    %c0_i32_0 = arith.constant 0 : i32
    %c0_i32_1 = arith.constant 0 : i32
    return %c0_i32, %c0_i32_0 : i32, i32
  }
  func.func @transform_2(%arg0: i32) -> (i32, i32) {
    %c0_i32 = arith.constant 0 : i32
    %c0_i32_0 = arith.constant 0 : i32
    %c0_i32_1 = arith.constant 0 : i32
    return %c0_i32, %c0_i32_0 : i32, i32
  }
  func.func @transform_3(%arg0: i32) -> (i32, i32) {
    %c0_i32 = arith.constant 0 : i32
    %c0_i32_0 = arith.constant 0 : i32
    %c0_i32_1 = arith.constant 0 : i32
    return %c0_i32, %c0_i32_0 : i32, i32
  }
  func.func @transform_4(%arg0: i32) -> (i32, i32) {
    %c0_i32 = arith.constant 0 : i32
    %c0_i32_0 = arith.constant 0 : i32
    return %c0_i32, %arg0 : i32, i32
  }
}

</mosaic_0001>

<llo_original>
// kernel: tpu_custom_call.1
$region0: #{tpu_custom_call.1}
  #allocation0 [shape = 'u32[]', space=smem, size = 0x4, offset = 0x4, fixed_abs, tag = 'smem constant byte address 0x4 - core index']
  #allocation1 [shape = 'u32[144,128]{1,0:T(1,128)}', space=vmem, size = 0x12000, scoped, tag = 'internal scratch']
  %s0 = inlined_call_operand.vmem [shape: f32[8,16], index: 0, kind: input, shape index: {}]
  %s1 = inlined_call_operand.vmem [shape: f32[128,16], index: 1, kind: input, shape index: {}]
  %s2 = inlined_call_operand.vmem [shape: f32[128,1], index: 2, kind: input, shape index: {}]
  %s3 = inlined_call_operand.vmem [shape: f32[2,128], index: 3, kind: input, shape index: {}]
  %s4 = inlined_call_operand.hbm [shape: f32[2,8], index: 4, kind: output, shape index: {}]
  %s5 = sld [smem:[#allocation0]]
  $region26: #{tpu_custom_call.1} parent=0
    _
  %s7 = ssub.s32 1, %s5
  %s8 = scalar_select 0, %s7, %s5
  $region1: #{tpu_custom_call.1} parent=0
    #allocation2 [shape = 'u8[1024]{0}', space=vmem, size = 0x400, scoped, tag = 'output window, operand 0, single buffered']
    #allocation3 [shape = 's32[1]{0}', space=sflag, size = 0x4, scoped, tag = 'scoped memory for tpu_custom_call.1']
    %9 = vsyncpa [#allocation3], 0
    // Predicated region
    $region2: #{tpu_custom_call.1} parent=1 // pred_check
      _
    $region3: #{tpu_custom_call.1} parent=1 // pred_check_branch
      %11 = sbr.rel (0) target = $region5
    $region4: #{tpu_custom_call.1} parent=1 // pred_region
      _
    $region5: #{tpu_custom_call.1} parent=1 // pred_fallthru
      _
    // Predicated region
    $region6: #{tpu_custom_call.1} parent=1 // pred_check
      _
    $region7: #{tpu_custom_call.1} parent=1 // pred_check_branch
      %13 = sbr.rel (0) target = $region9
    $region8: #{tpu_custom_call.1} parent=1 // pred_region
      _
    $region9: #{tpu_custom_call.1} parent=1 // pred_fallthru
      _
    // Predicated region
    $region10: #{tpu_custom_call.1} parent=1 // pred_check
      _
    $region11: #{tpu_custom_call.1} parent=1 // pred_check_branch
      %15 = sbr.rel (0) target = $region13
    $region12: #{tpu_custom_call.1} parent=1 // pred_region
      _
    $region13: #{tpu_custom_call.1} parent=1 // pred_fallthru
      _
    // Predicated region
    $region14: #{tpu_custom_call.1} parent=1 // pred_check
      _
    $region15: #{tpu_custom_call.1} parent=1 // pred_check_branch
      %17 = sbr.rel (0) target = $region17
    $region16: #{tpu_custom_call.1} parent=1 // pred_region
      _
    $region17: #{tpu_custom_call.1} parent=1 // pred_fallthru
      _
    %v18 = vld [vmem:[%s0] sm:$0xff]
    %v19 = vld [vmem:[%s1] sm:$0xff]
    %v20 = vld [vmem:[%s1 + $0x8] sm:$0xff]
    %v21 = vld [vmem:[%s1 + $0x10] sm:$0xff]
    %v22 = vld [vmem:[%s1 + $0x18] sm:$0xff]
    %v23 = vld [vmem:[%s1 + $0x20] sm:$0xff]
    %v24 = vld [vmem:[%s1 + $0x28] sm:$0xff]
    %v25 = vld [vmem:[%s1 + $0x30] sm:$0xff]
    %v26 = vld [vmem:[%s1 + $0x38] sm:$0xff]
    %v27 = vld [vmem:[%s1 + $0x40] sm:$0xff]
    %v28 = vld [vmem:[%s1 + $0x48] sm:$0xff]
    %v29 = vld [vmem:[%s1 + $0x50] sm:$0xff]
    %v30 = vld [vmem:[%s1 + $0x58] sm:$0xff]
    %v31 = vld [vmem:[%s1 + $0x60] sm:$0xff]
    %v32 = vld [vmem:[%s1 + $0x68] sm:$0xff]
    %v33 = vld [vmem:[%s1 + $0x70] sm:$0xff]
    %v34 = vld [vmem:[%s1 + $0x78] sm:$0xff]
    %v35 = vld [vmem:[%s2] sm:$0xff]
    %v36 = vld [vmem:[%s2 + $0x8] sm:$0xff]
    %v37 = vld [vmem:[%s2 + $0x10] sm:$0xff]
    %v38 = vld [vmem:[%s2 + $0x18] sm:$0xff]
    %v39 = vld [vmem:[%s2 + $0x20] sm:$0xff]
    %v40 = vld [vmem:[%s2 + $0x28] sm:$0xff]
    %v41 = vld [vmem:[%s2 + $0x30] sm:$0xff]
    %v42 = vld [vmem:[%s2 + $0x38] sm:$0xff]
    %v43 = vld [vmem:[%s2 + $0x40] sm:$0xff]
    %v44 = vld [vmem:[%s2 + $0x48] sm:$0xff]
    %v45 = vld [vmem:[%s2 + $0x50] sm:$0xff]
    %v46 = vld [vmem:[%s2 + $0x58] sm:$0xff]
    %v47 = vld [vmem:[%s2 + $0x60] sm:$0xff]
    %v48 = vld [vmem:[%s2 + $0x68] sm:$0xff]
    %v49 = vld [vmem:[%s2 + $0x70] sm:$0xff]
    %v50 = vld [vmem:[%s2 + $0x78] sm:$0xff]
    %52 = vset.pattern.permute.xlu0 0
    %53 = vperm.xlu0 %52, %v35
    %v54 = vpop.permute.xlu0 %53
    %57 = vset.pattern.permute.xlu0 0
    %58 = vperm.xlu0 %57, %v36
    %v59 = vpop.permute.xlu0 %58
    %62 = vset.pattern.permute.xlu0 0
    %63 = vperm.xlu0 %62, %v37
    %v64 = vpop.permute.xlu0 %63
    %67 = vset.pattern.permute.xlu0 0
    %68 = vperm.xlu0 %67, %v38
    %v69 = vpop.permute.xlu0 %68
    %72 = vset.pattern.permute.xlu0 0
    %73 = vperm.xlu0 %72, %v39
    %v74 = vpop.permute.xlu0 %73
    %77 = vset.pattern.permute.xlu0 0
    %78 = vperm.xlu0 %77, %v40
    %v79 = vpop.permute.xlu0 %78
    %82 = vset.pattern.permute.xlu0 0
    %83 = vperm.xlu0 %82, %v41
    %v84 = vpop.permute.xlu0 %83
    %87 = vset.pattern.permute.xlu0 0
    %88 = vperm.xlu0 %87, %v42
    %v89 = vpop.permute.xlu0 %88
    %92 = vset.pattern.permute.xlu0 0
    %93 = vperm.xlu0 %92, %v43
    %v94 = vpop.permute.xlu0 %93
    %97 = vset.pattern.permute.xlu0 0
    %98 = vperm.xlu0 %97, %v44
    %v99 = vpop.permute.xlu0 %98
    %102 = vset.pattern.permute.xlu0 0
    %103 = vperm.xlu0 %102, %v45
    %v104 = vpop.permute.xlu0 %103
    %107 = vset.pattern.permute.xlu0 0
    %108 = vperm.xlu0 %107, %v46
    %v109 = vpop.permute.xlu0 %108
    %112 = vset.pattern.permute.xlu0 0
    %113 = vperm.xlu0 %112, %v47
    %v114 = vpop.permute.xlu0 %113
    %117 = vset.pattern.permute.xlu0 0
    %118 = vperm.xlu0 %117, %v48
    %v119 = vpop.permute.xlu0 %118
    %122 = vset.pattern.permute.xlu0 0
    %123 = vperm.xlu0 %122, %v49
    %v124 = vpop.permute.xlu0 %123
    %127 = vset.pattern.permute.xlu0 0
    %128 = vperm.xlu0 %127, %v50
    %v129 = vpop.permute.xlu0 %128
    %vm131 = vcmask 130048
    %v133 = vsel %vm131, %v19, 0
    %v136 = vsel %vm131, %v20, 0
    %v139 = vsel %vm131, %v21, 0
    %v142 = vsel %vm131, %v22, 0
    %v145 = vsel %vm131, %v23, 0
    %v148 = vsel %vm131, %v24, 0
    %v151 = vsel %vm131, %v25, 0
    %v154 = vsel %vm131, %v26, 0
    %v157 = vsel %vm131, %v27, 0
    %v160 = vsel %vm131, %v28, 0
    %v163 = vsel %vm131, %v29, 0
    %v166 = vsel %vm131, %v30, 0
    %v169 = vsel %vm131, %v31, 0
    %v172 = vsel %vm131, %v32, 0
    %v175 = vsel %vm131, %v33, 0
    %v178 = vsel %vm131, %v34, 0
    %v181 = vsel %vm131, %v18, 0
    %183 = vmatprep.subr.mxu0 0.0
    %184 = vmatpush1.xpose.msra.mxu0 0.0
    %185 = vmatprep.subr.mxu0 0.0
    %186 = vmatpush1.xpose.msra.mxu0 0.0
    %187 = vmatprep.subr.mxu0 0.0
    %188 = vmatpush1.xpose.msra.mxu0 0.0
    %189 = vmatprep.subr.mxu0 0.0
    %190 = vmatpush1.xpose.msra.mxu0 0.0
    %191 = vmatprep.subr.mxu0 0.0
    %192 = vmatpush1.xpose.msra.mxu0 0.0
    %193 = vmatprep.subr.mxu0 0.0
    %194 = vmatpush1.xpose.msra.mxu0 0.0
    %195 = vmatprep.subr.mxu0 0.0
    %196 = vmatpush1.xpose.msra.mxu0 0.0
    %197 = vmatprep.subr.mxu0 0.0
    %198 = vmatpush1.xpose.msra.mxu0 0.0
    %199 = vmatprep.subr.mxu0 0.0
    %200 = vmatpush1.xpose.msra.mxu0 0.0
    %201 = vmatprep.subr.mxu0 0.0
    %202 = vmatpush1.xpose.msra.mxu0 0.0
    %203 = vmatprep.subr.mxu0 0.0
    %204 = vmatpush1.xpose.msra.mxu0 0.0
    %205 = vmatprep.subr.mxu0 0.0
    %206 = vmatpush1.xpose.msra.mxu0 0.0
    %207 = vmatprep.subr.mxu0 0.0
    %208 = vmatpush1.xpose.msra.mxu0 0.0
    %209 = vmatprep.subr.mxu0 0.0
    %210 = vmatpush1.xpose.msra.mxu0 0.0
    %211 = vmatprep.subr.mxu0 0.0
    %212 = vmatpush1.xpose.msra.mxu0 0.0
    %213 = vmatprep.subr.mxu0 0.0
    %214 = vmatpush1.xpose.msra.mxu0 %v181
    %215 = vmatprep.subr.mxu0 0.0
    %216 = vmatpush2.xpose.msra.mxu0 0.0
    %217 = vmatprep.subr.mxu0 0.0
    %218 = vmatpush2.xpose.msra.mxu0 0.0
    %219 = vmatprep.subr.mxu0 0.0
    %220 = vmatpush2.xpose.msra.mxu0 0.0
    %221 = vmatprep.subr.mxu0 0.0
    %222 = vmatpush2.xpose.msra.mxu0 0.0
    %223 = vmatprep.subr.mxu0 0.0
    %224 = vmatpush2.xpose.msra.mxu0 0.0
    %225 = vmatprep.subr.mxu0 0.0
    %226 = vmatpush2.xpose.msra.mxu0 0.0
    %227 = vmatprep.subr.mxu0 0.0
    %228 = vmatpush2.xpose.msra.mxu0 0.0
    %229 = vmatprep.subr.mxu0 0.0
    %230 = vmatpush2.xpose.msra.mxu0 0.0
    %231 = vmatprep.subr.mxu0 0.0
    %232 = vmatpush2.xpose.msra.mxu0 0.0
    %233 = vmatprep.subr.mxu0 0.0
    %234 = vmatpush2.xpose.msra.mxu0 0.0
    %235 = vmatprep.subr.mxu0 0.0
    %236 = vmatpush2.xpose.msra.mxu0 0.0
    %237 = vmatprep.subr.mxu0 0.0
    %238 = vmatpush2.xpose.msra.mxu0 0.0
    %239 = vmatprep.subr.mxu0 0.0
    %240 = vmatpush2.xpose.msra.mxu0 0.0
    %241 = vmatprep.subr.mxu0 0.0
    %242 = vmatpush2.xpose.msra.mxu0 0.0
    %243 = vmatprep.subr.mxu0 0.0
    %244 = vmatpush2.xpose.msra.mxu0 0.0
    %245 = vmatprep.subr.mxu0 0.0
    %246 = vmatpush2.xpose.msra.mxu0 0.0
    %247 = vmatprep.mubr.f32.mxu0 0.0
    %248 = vmatmul.mubr.f32.gmra.mxu0 %v133
    %v249 = vpop.f32.mrf.mxu0
    %v250 = vadd.f32 %v54, %v249
    %v251 = vpop.f32.mrf.mxu0
    %252 = vmatprep.mubr.f32.mxu0 0.0
    %253 = vmatmul.mubr.f32.gmra.mxu0 %v136
    %v254 = vpop.f32.mrf.mxu0
    %v255 = vadd.f32 %v59, %v254
    %v256 = vpop.f32.mrf.mxu0
    %257 = vmatprep.mubr.f32.mxu0 0.0
    %258 = vmatmul.mubr.f32.gmra.mxu0 %v139
    %v259 = vpop.f32.mrf.mxu0
    %v260 = vadd.f32 %v64, %v259
    %v261 = vpop.f32.mrf.mxu0
    %262 = vmatprep.mubr.f32.mxu0 0.0
    %263 = vmatmul.mubr.f32.gmra.mxu0 %v142
    %v264 = vpop.f32.mrf.mxu0
    %v265 = vadd.f32 %v69, %v264
    %v266 = vpop.f32.mrf.mxu0
    %267 = vmatprep.mubr.f32.mxu0 0.0
    %268 = vmatmul.mubr.f32.gmra.mxu0 %v145
    %v269 = vpop.f32.mrf.mxu0
    %v270 = vadd.f32 %v74, %v269
    %v271 = vpop.f32.mrf.mxu0
    %272 = vmatprep.mubr.f32.mxu0 0.0
    %273 = vmatmul.mubr.f32.gmra.mxu0 %v148
    %v274 = vpop.f32.mrf.mxu0
    %v275 = vadd.f32 %v79, %v274
    %v276 = vpop.f32.mrf.mxu0
    %277 = vmatprep.mubr.f32.mxu0 0.0
    %278 = vmatmul.mubr.f32.gmra.mxu0 %v151
    %v279 = vpop.f32.mrf.mxu0
    %v280 = vadd.f32 %v84, %v279
    %v281 = vpop.f32.mrf.mxu0
    %282 = vmatprep.mubr.f32.mxu0 0.0
    %283 = vmatmul.mubr.f32.gmra.mxu0 %v154
    %v284 = vpop.f32.mrf.mxu0
    %v285 = vadd.f32 %v89, %v284
    %v286 = vpop.f32.mrf.mxu0
    %287 = vmatprep.mubr.f32.mxu0 0.0
    %288 = vmatmul.mubr.f32.gmra.mxu0 %v157
    %v289 = vpop.f32.mrf.mxu0
    %v290 = vadd.f32 %v94, %v289
    %v291 = vpop.f32.mrf.mxu0
    %292 = vmatprep.mubr.f32.mxu0 0.0
    %293 = vmatmul.mubr.f32.gmra.mxu0 %v160
    %v294 = vpop.f32.mrf.mxu0
    %v295 = vadd.f32 %v99, %v294
    %v296 = vpop.f32.mrf.mxu0
    %297 = vmatprep.mubr.f32.mxu0 0.0
    %298 = vmatmul.mubr.f32.gmra.mxu0 %v163
    %v299 = vpop.f32.mrf.mxu0
    %v300 = vadd.f32 %v104, %v299
    %v301 = vpop.f32.mrf.mxu0
    %302 = vmatprep.mubr.f32.mxu0 0.0
    %303 = vmatmul.mubr.f32.gmra.mxu0 %v166
    %v304 = vpop.f32.mrf.mxu0
    %v305 = vadd.f32 %v109, %v304
    %v306 = vpop.f32.mrf.mxu0
    %307 = vmatprep.mubr.f32.mxu0 0.0
    %308 = vmatmul.mubr.f32.gmra.mxu0 %v169
    %v309 = vpop.f32.mrf.mxu0
    %v310 = vadd.f32 %v114, %v309
    %v311 = vpop.f32.mrf.mxu0
    %312 = vmatprep.mubr.f32.mxu0 0.0
    %313 = vmatmul.mubr.f32.gmra.mxu0 %v172
    %v314 = vpop.f32.mrf.mxu0
    %v315 = vadd.f32 %v119, %v314
    %v316 = vpop.f32.mrf.mxu0
    %317 = vmatprep.mubr.f32.mxu0 0.0
    %318 = vmatmul.mubr.f32.gmra.mxu0 %v175
    %v319 = vpop.f32.mrf.mxu0
    %v320 = vadd.f32 %v124, %v319
    %v321 = vpop.f32.mrf.mxu0
    %322 = vmatprep.mubr.f32.mxu0 0.0
    %323 = vmatmul.mubr.f32.gmra.mxu0 %v178
    %v324 = vpop.f32.mrf.mxu0
    %v325 = vadd.f32 %v129, %v324
    %v326 = vpop.f32.mrf.mxu0
    %327 = vdwg.mxu0
    %v328 = vtanh.pop %v250
    %v329 = vtanh.pop %v255
    %v330 = vtanh.pop %v260
    %v331 = vtanh.pop %v265
    %v332 = vtanh.pop %v270
    %v333 = vtanh.pop %v275
    %v334 = vtanh.pop %v280
    %v335 = vtanh.pop %v285
    %v336 = vtanh.pop %v290
    %v337 = vtanh.pop %v295
    %v338 = vtanh.pop %v300
    %v339 = vtanh.pop %v305
    %v340 = vtanh.pop %v310
    %v341 = vtanh.pop %v315
    %v342 = vtanh.pop %v320
    %v343 = vtanh.pop %v325
    %v344 = vld [vmem:[%s3] sm:$0x3]
    %345 = vmatprep.subr.mxu0 0.0
    %346 = vmatpush1.msra.mxu0 %v343
    %347 = vmatprep.subr.mxu0 0.0
    %348 = vmatpush1.msra.mxu0 %v342
    %349 = vmatprep.subr.mxu0 0.0
    %350 = vmatpush1.msra.mxu0 %v341
    %351 = vmatprep.subr.mxu0 0.0
    %352 = vmatpush1.msra.mxu0 %v340
    %353 = vmatprep.subr.mxu0 0.0
    %354 = vmatpush1.msra.mxu0 %v339
    %355 = vmatprep.subr.mxu0 0.0
    %356 = vmatpush1.msra.mxu0 %v338
    %357 = vmatprep.subr.mxu0 0.0
    %358 = vmatpush1.msra.mxu0 %v337
    %359 = vmatprep.subr.mxu0 0.0
    %360 = vmatpush1.msra.mxu0 %v336
    %361 = vmatprep.subr.mxu0 0.0
    %362 = vmatpush1.msra.mxu0 %v335
    %363 = vmatprep.subr.mxu0 0.0
    %364 = vmatpush1.msra.mxu0 %v334
    %365 = vmatprep.subr.mxu0 0.0
    %366 = vmatpush1.msra.mxu0 %v333
    %367 = vmatprep.subr.mxu0 0.0
    %368 = vmatpush1.msra.mxu0 %v332
    %369 = vmatprep.subr.mxu0 0.0
    %370 = vmatpush1.msra.mxu0 %v331
    %371 = vmatprep.subr.mxu0 0.0
    %372 = vmatpush1.msra.mxu0 %v330
    %373 = vmatprep.subr.mxu0 0.0
    %374 = vmatpush1.msra.mxu0 %v329
    %375 = vmatprep.subr.mxu0 0.0
    %376 = vmatpush1.msra.mxu0 %v328
    %377 = vmatprep.subr.mxu0 0.0
    %378 = vmatpush2.msra.mxu0 0.0
    %379 = vmatprep.subr.mxu0 0.0
    %380 = vmatpush2.msra.mxu0 0.0
    %381 = vmatprep.subr.mxu0 0.0
    %382 = vmatpush2.msra.mxu0 0.0
    %383 = vmatprep.subr.mxu0 0.0
    %384 = vmatpush2.msra.mxu0 0.0
    %385 = vmatprep.subr.mxu0 0.0
    %386 = vmatpush2.msra.mxu0 0.0
    %387 = vmatprep.subr.mxu0 0.0
    %388 = vmatpush2.msra.mxu0 0.0
    %389 = vmatprep.subr.mxu0 0.0
    %390 = vmatpush2.msra.mxu0 0.0
    %391 = vmatprep.subr.mxu0 0.0
    %392 = vmatpush2.msra.mxu0 0.0
    %393 = vmatprep.subr.mxu0 0.0
    %394 = vmatpush2.msra.mxu0 0.0
    %395 = vmatprep.subr.mxu0 0.0
    %396 = vmatpush2.msra.mxu0 0.0
    %397 = vmatprep.subr.mxu0 0.0
    %398 = vmatpush2.msra.mxu0 0.0
    %399 = vmatprep.subr.mxu0 0.0
    %400 = vmatpush2.msra.mxu0 0.0
    %401 = vmatprep.subr.mxu0 0.0
    %402 = vmatpush2.msra.mxu0 0.0
    %403 = vmatprep.subr.mxu0 0.0
    %404 = vmatpush2.msra.mxu0 0.0
    %405 = vmatprep.subr.mxu0 0.0
    %406 = vmatpush2.msra.mxu0 0.0
    %407 = vmatprep.subr.mxu0 0.0
    %408 = vmatpush2.msra.mxu0 0.0
    %409 = vmatprep.mubr.f32.mxu0 0.0
    %410 = vmatmul.mubr.f32.gmra.mxu0 %v344
    %v411 = vpop.f32.mrf.mxu0
    %v412 = vadd.f32 0.0, %v411
    %v413 = vpop.f32.mrf.mxu0
    %414 = vdwg.mxu0
    %v415 = vlaneseq
    %v416 = vshrl.u32 %v415, 7
    %v417 = vsub.f32 %v412, 1.0
    %v418 = vmax.f32 %v417, -20.0
    %v419 = vmin.f32 %v418, 0.0
    %v420 = vmul.f32 %v419, 1.442695
    %v421 = vpow.pop %v420
    %vm422 = vcmp.eq.s32.totalorder %v416, 1
    %v423 = vsel %vm422, %v421, %v412
    %vm424 = vcmask 58368
    %425 = vst.msk [vmem:[#allocation2] sm:$0x3] %vm424, %v423
    // Predicated region
    $region18: #{tpu_custom_call.1} parent=1 // pred_check
      _
    $region19: #{tpu_custom_call.1} parent=1 // pred_check_branch
      %427 = sbr.rel (0) target = $region21
    $region20: #{tpu_custom_call.1} parent=1 // pred_region
      %s429 = ssub.s32 32, 32
      %430 = vsyncadd [#allocation3], %s429
      %s432 = sshll.u32 [#allocation2], 4
      %s433 = int_to_ptr.vmem [resolvable:$true] %s432
      %435 = dma.vmem_to_hbm [thread:$0]  %s433, 32, %s4, [#allocation3]
    $region21: #{tpu_custom_call.1} parent=1 // pred_fallthru
      _
    // Predicated region
    $region22: #{tpu_custom_call.1} parent=1 // pred_check
      _
    $region23: #{tpu_custom_call.1} parent=1 // pred_check_branch
      %437 = sbr.rel (0) target = $region25
    $region24: #{tpu_custom_call.1} parent=1 // pred_region
      %438 = dma.done [#allocation3], 32
    $region25: #{tpu_custom_call.1} parent=1 // pred_fallthru
      _
    %439 = vsyncpa [#allocation3], 1

</llo_original>
